<compile_context>
chip_gen: v6e
topology: v6e:2x2x1
jax: 0.10.0
libtpu: 0.0.40
codegen_flags: <defaults>
</compile_context>

<pallas_src>
import jax
import jax.numpy as jnp
from jax.experimental import pallas as pl
from jax.experimental.pallas import tpu as pltpu

_LANES = 128
_SUBLANES = 8
_TILE = _SUBLANES * _LANES            # 1024 f32 = one (8,128) vreg tile = 4 KiB
_N_SRC = 2
_MAX_BLOCK_TILES = 512                # 512 tiles -> 2 MiB wav block / 4 MiB out block
_VMEM_LIMIT_BYTES = 32 * 1024 * 1024  # safe on v5e/v6e (128 MiB phys) and v7x (64 MiB phys)


def _cdiv(a, b):
    return -(-a // b)


# ----------------------------------------------------------------------------
# Kernel 1 (fused): separation + global |wav| / |out| accumulation.
#   wav block : (1, blk, 8, 128)
#   out block : (1, n_src, blk, 8, 128)
#   acc blocks: (1, 8, 128), indexed only by batch -> resident over time axis.
# ----------------------------------------------------------------------------
def _sep_abssum_kernel(x_ref, out_ref, wacc_ref, oacc_ref):
    @pl.when(pl.program_id(1) == 0)
    def _():
        wacc_ref[...] = jnp.zeros_like(wacc_ref)
        oacc_ref[...] = jnp.zeros_like(oacc_ref)

    x = x_ref[0]                      # (blk, 8, 128)
    # TODO(synk): BaseModel.forward is abstract (raises NotImplementedError);
    # deterministic elementwise stand-in separator so the rescale path is real.
    src0 = 0.5 * x
    src1 = -0.3 * x
    out_ref[0, 0] = src0
    out_ref[0, 1] = src1

    # Sublane-major reduction over the leading axis: pure VPU vreg adds,
    # no cross-lane XLU work in the hot loop.
    wacc_ref[...] += jnp.sum(jnp.abs(x), axis=0)[None]
    oacc_ref[...] += jnp.sum(jnp.abs(src0) + jnp.abs(src1), axis=0)[None]


def _separate_and_abssum(wav4d, blk, nb):
    B, n_t, _, _ = wav4d.shape
    n_elems = B * n_t * _TILE
    return pl.pallas_call(
        _sep_abssum_kernel,
        out_shape=(
            jax.ShapeDtypeStruct((B, _N_SRC, n_t, _SUBLANES, _LANES), jnp.float32),
            jax.ShapeDtypeStruct((B, _SUBLANES, _LANES), jnp.float32),
            jax.ShapeDtypeStruct((B, _SUBLANES, _LANES), jnp.float32),
        ),
        grid=(B, nb),
        in_specs=[
            pl.BlockSpec((1, blk, _SUBLANES, _LANES), lambda b, t: (b, t, 0, 0)),
        ],
        out_specs=(
            pl.BlockSpec((1, _N_SRC, blk, _SUBLANES, _LANES),
                         lambda b, t: (b, 0, t, 0, 0)),
            pl.BlockSpec((1, _SUBLANES, _LANES), lambda b, t: (b, 0, 0)),
            pl.BlockSpec((1, _SUBLANES, _LANES), lambda b, t: (b, 0, 0)),
        ),
        compiler_params=pltpu.CompilerParams(
            dimension_semantics=("parallel", "arbitrary"),
            vmem_limit_bytes=_VMEM_LIMIT_BYTES),
        cost_estimate=pl.CostEstimate(
            flops=8 * n_elems,
            transcendentals=0,
            bytes_accessed=(1 + _N_SRC) * n_elems * 4),
    )(wav4d)


# ----------------------------------------------------------------------------
# Kernel 2: in-place elementwise rescale  out *= scale  (scalar scale in SMEM),
# same tiling as kernel 1 so blocks always divide evenly.
# ----------------------------------------------------------------------------
def _scale_kernel(scale_ref, x_ref, o_ref):
    o_ref[...] = x_ref[...] * scale_ref[0, 0]


def _rescale(out5d, scale, blk, nb):
    B, _, n_t, _, _ = out5d.shape
    n_elems = B * _N_SRC * n_t * _TILE
    scale_arr = jnp.reshape(scale.astype(jnp.float32), (1, 1))
    return pl.pallas_call(
        _scale_kernel,
        out_shape=jax.ShapeDtypeStruct(out5d.shape, jnp.float32),
        grid=(B, nb),
        in_specs=[
            pl.BlockSpec(memory_space=pltpu.SMEM),                       # scalar
            pl.BlockSpec((1, _N_SRC, blk, _SUBLANES, _LANES),
                         lambda b, t: (b, 0, t, 0, 0)),                  # data
        ],
        out_specs=pl.BlockSpec((1, _N_SRC, blk, _SUBLANES, _LANES),
                               lambda b, t: (b, 0, t, 0, 0)),
        compiler_params=pltpu.CompilerParams(
            dimension_semantics=("parallel", "parallel"),
            vmem_limit_bytes=_VMEM_LIMIT_BYTES),
        cost_estimate=pl.CostEstimate(
            flops=n_elems,
            transcendentals=0,
            bytes_accessed=2 * n_elems * 4),
        input_output_aliases={1: 0},                                     # in place
    )(scale_arr, out5d)


# ----------------------------------------------------------------------------
# Glue
# ----------------------------------------------------------------------------
def _block_split(n_t):
    # Near-equal split so padding waste is < one block; blk <= _MAX_BLOCK_TILES.
    nb = max(1, _cdiv(n_t, _MAX_BLOCK_TILES))
    blk = _cdiv(n_t, nb)
    return blk, nb


@jax.jit
def _separate_and_rescale(wav):
    """Equivalent of BaseModel.torch_separate:
        out = self._separate(wav); out *= wav.abs().sum() / out.abs().sum()
    """
    orig_shape = wav.shape
    T = orig_shape[-1]
    wav2d = wav.astype(jnp.float32).reshape(-1, T)
    B = wav2d.shape[0]

    n_t = _cdiv(T, _TILE)
    blk, nb = _block_split(n_t)
    n_t_pad = blk * nb
    T_pad = n_t_pad * _TILE
    if T_pad != T:
        # Single pad; zeros are neutral for the |.|-sums and sliced off below.
        wav2d = jnp.pad(wav2d, ((0, 0), (0, T_pad - T)))
    wav4d = wav2d.reshape(B, n_t_pad, _SUBLANES, _LANES)

    out5d, wacc, oacc = _separate_and_abssum(wav4d, blk, nb)

    # Tiny final reduce of the (B, 8, 128) partial sums in XLA glue.
    s_in = jnp.sum(wacc)
    s_out = jnp.sum(oacc)
    scale = s_in / s_out              # mirrors torch semantics (no zero guard)

    scaled = _rescale(out5d, scale, blk, nb)

    out = scaled.reshape(B, _N_SRC, T_pad)
    if T_pad != T:
        out = out[:, :, :T]
    return out.reshape(orig_shape[:-1] + (_N_SRC, T))


# ----------------------------------------------------------------------------
# BaseModel-equivalent separation interface
# ----------------------------------------------------------------------------
class BaseModelPallas:
    """JAX/Pallas port of asteroid BaseModel's `torch_separate` hot path."""

    sample_rate = 8000.0

    def forward(self, *args, **kwargs):
        raise NotImplementedError  # abstract in the original module

    def _separate(self, wav):
        # Pure-jnp stand-in separator (same math the fused kernel embeds).
        return jnp.stack([0.5 * wav, -0.3 * wav], axis=-2)

    def separate(self, wav):
        return _separate_and_rescale(wav)


if __name__ == "__main__":
    key = jax.random.PRNGKey(0)
    batch, time = 2, 1024
    wav = jax.random.normal(key, (batch, time), dtype=jnp.float32)

    model = BaseModelPallas()
    est = model.separate(wav)
    est = jax.block_until_ready(est)

    # Reference check (pure jnp) of the separation + rescale semantics.
    ref_srcs = model._separate(wav)
    ref = ref_srcs * (jnp.sum(jnp.abs(wav)) / jnp.sum(jnp.abs(ref_srcs)))
    assert est.shape == (batch, _N_SRC, time)
    assert jnp.allclose(est, ref, rtol=1e-5, atol=1e-5)

    print("KERNEL_OK")
</pallas_src>

<mosaic_0001>
module attributes {stable_mosaic.version = 11 : i64} {
  func.func @_sep_abssum_kernel(%arg0: i32, %arg1: i32, %arg2: memref<1x1x8x128xf32, #tpu.memory_space<vmem>>, %arg3: memref<1x2x1x8x128xf32, #tpu.memory_space<vmem>>, %arg4: memref<1x8x128xf32, #tpu.memory_space<vmem>>, %arg5: memref<1x8x128xf32, #tpu.memory_space<vmem>>) attributes {dimension_semantics = [#tpu.dimension_semantics<parallel>, #tpu.dimension_semantics<arbitrary>], iteration_bounds = array<i64: 2, 1>, scalar_prefetch = 0 : i64, scratch_operands = 0 : i64, tpu.core_type = #tpu.core_type<tc>, window_params = [{transform_indices = @transform_0, window_bounds = array<i64: 1, 1, 8, 128>}, {transform_indices = @transform_1, window_bounds = array<i64: 1, 2, 1, 8, 128>}, {transform_indices = @transform_2, window_bounds = array<i64: 1, 8, 128>}, {transform_indices = @transform_3, window_bounds = array<i64: 1, 8, 128>}]} {
    %c0_i32 = arith.constant 0 : i32
    %0 = arith.cmpi eq, %arg1, %c0_i32 : i32
    %1 = arith.extui %0 : i1 to i32
    %c0_i32_0 = arith.constant 0 : i32
    %2 = arith.cmpi ne, %1, %c0_i32_0 : i32
    scf.if %2 {
      %cst_28 = arith.constant 0.000000e+00 : f32
      %29 = vector.broadcast %cst_28 : f32 to vector<1x8x128xf32>
      %c0_29 = arith.constant 0 : index
      %c0_30 = arith.constant 0 : index
      %c0_31 = arith.constant 0 : index
      %30 = vector.load %arg4[%c0_29, %c0_30, %c0_31] : memref<1x8x128xf32, #tpu.memory_space<vmem>>, vector<1x8x128xf32>
      tpu.vector_store %arg4[%c0_29, %c0_30, %c0_31], %29 {strides = array<i32>} : memref<1x8x128xf32, #tpu.memory_space<vmem>>, vector<1x8x128xf32>,
      %cst_32 = arith.constant 0.000000e+00 : f32
      %31 = vector.broadcast %cst_32 : f32 to vector<1x8x128xf32>
      %c0_33 = arith.constant 0 : index
      %c0_34 = arith.constant 0 : index
      %c0_35 = arith.constant 0 : index
      %32 = vector.load %arg5[%c0_33, %c0_34, %c0_35] : memref<1x8x128xf32, #tpu.memory_space<vmem>>, vector<1x8x128xf32>
      tpu.vector_store %arg5[%c0_33, %c0_34, %c0_35], %31 {strides = array<i32>} : memref<1x8x128xf32, #tpu.memory_space<vmem>>, vector<1x8x128xf32>,
    } else {
    }
    %c0 = arith.constant 0 : index
    %c0_1 = arith.constant 0 : index
    %c0_2 = arith.constant 0 : index
    %c0_3 = arith.constant 0 : index
    %3 = vector.load %arg2[%c0, %c0_1, %c0_2, %c0_3] : memref<1x1x8x128xf32, #tpu.memory_space<vmem>>, vector<1x1x8x128xf32>
    %4 = vector.shape_cast %3 : vector<1x1x8x128xf32> to vector<1x8x128xf32>
    %cst = arith.constant 5.000000e-01 : f32
    %5 = vector.broadcast %cst : f32 to vector<1x8x128xf32>
    %6 = arith.mulf %5, %4 : vector<1x8x128xf32>
    %cst_4 = arith.constant -3.000000e-01 : f32
    %7 = vector.broadcast %cst_4 : f32 to vector<1x8x128xf32>
    %8 = arith.mulf %7, %4 : vector<1x8x128xf32>
    %c0_5 = arith.constant 0 : index
    %c0_6 = arith.constant 0 : index
    %c0_7 = arith.constant 0 : index
    %c0_8 = arith.constant 0 : index
    %c0_9 = arith.constant 0 : index
    %9 = vector.load %arg3[%c0_5, %c0_6, %c0_7, %c0_8, %c0_9] : memref<1x2x1x8x128xf32, #tpu.memory_space<vmem>>, vector<1x1x1x8x128xf32>
    %10 = vector.shape_cast %9 : vector<1x1x1x8x128xf32> to vector<1x8x128xf32>
    %11 = vector.shape_cast %6 : vector<1x8x128xf32> to vector<1x1x1x8x128xf32>
    tpu.vector_store %arg3[%c0_5, %c0_6, %c0_7, %c0_8, %c0_9], %11 {strides = array<i32>} : memref<1x2x1x8x128xf32, #tpu.memory_space<vmem>>, vector<1x1x1x8x128xf32>,
    %c0_10 = arith.constant 0 : index
    %c1 = arith.constant 1 : index
    %c0_11 = arith.constant 0 : index
    %c0_12 = arith.constant 0 : index
    %c0_13 = arith.constant 0 : index
    %12 = vector.load %arg3[%c0_10, %c1, %c0_11, %c0_12, %c0_13] : memref<1x2x1x8x128xf32, #tpu.memory_space<vmem>>, vector<1x1x1x8x128xf32>
    %13 = vector.shape_cast %12 : vector<1x1x1x8x128xf32> to vector<1x8x128xf32>
    %14 = vector.shape_cast %8 : vector<1x8x128xf32> to vector<1x1x1x8x128xf32>
    tpu.vector_store %arg3[%c0_10, %c1, %c0_11, %c0_12, %c0_13], %14 {strides = array<i32>} : memref<1x2x1x8x128xf32, #tpu.memory_space<vmem>>, vector<1x1x1x8x128xf32>,
    %c0_14 = arith.constant 0 : index
    %c0_15 = arith.constant 0 : index
    %c0_16 = arith.constant 0 : index
    %15 = vector.load %arg4[%c0_14, %c0_15, %c0_16] : memref<1x8x128xf32, #tpu.memory_space<vmem>>, vector<1x8x128xf32>
    %16 = math.absf %4 : vector<1x8x128xf32>
    %cst_17 = arith.constant dense<0.000000e+00> : vector<8x128xf32>
    %17 = vector.multi_reduction <add>, %16, %cst_17 [0] : vector<1x8x128xf32> to vector<8x128xf32>
    %18 = vector.shape_cast %17 : vector<8x128xf32> to vector<1x8x128xf32>
    %19 = arith.addf %15, %18 : vector<1x8x128xf32>
    %c0_18 = arith.constant 0 : index
    %c0_19 = arith.constant 0 : index
    %c0_20 = arith.constant 0 : index
    %20 = vector.load %arg4[%c0_18, %c0_19, %c0_20] : memref<1x8x128xf32, #tpu.memory_space<vmem>>, vector<1x8x128xf32>
    tpu.vector_store %arg4[%c0_18, %c0_19, %c0_20], %19 {strides = array<i32>} : memref<1x8x128xf32, #tpu.memory_space<vmem>>, vector<1x8x128xf32>,
    %c0_21 = arith.constant 0 : index
    %c0_22 = arith.constant 0 : index
    %c0_23 = arith.constant 0 : index
    %21 = vector.load %arg5[%c0_21, %c0_22, %c0_23] : memref<1x8x128xf32, #tpu.memory_space<vmem>>, vector<1x8x128xf32>
    %22 = math.absf %6 : vector<1x8x128xf32>
    %23 = math.absf %8 : vector<1x8x128xf32>
    %24 = arith.addf %22, %23 : vector<1x8x128xf32>
    %cst_24 = arith.constant dense<0.000000e+00> : vector<8x128xf32>
    %25 = vector.multi_reduction <add>, %24, %cst_24 [0] : vector<1x8x128xf32> to vector<8x128xf32>
    %26 = vector.shape_cast %25 : vector<8x128xf32> to vector<1x8x128xf32>
    %27 = arith.addf %21, %26 : vector<1x8x128xf32>
    %c0_25 = arith.constant 0 : index
    %c0_26 = arith.constant 0 : index
    %c0_27 = arith.constant 0 : index
    %28 = vector.load %arg5[%c0_25, %c0_26, %c0_27] : memref<1x8x128xf32, #tpu.memory_space<vmem>>, vector<1x8x128xf32>
    tpu.vector_store %arg5[%c0_25, %c0_26, %c0_27], %27 {strides = array<i32>} : memref<1x8x128xf32, #tpu.memory_space<vmem>>, vector<1x8x128xf32>,
    return
  }
  func.func @transform_0(%arg0: i32, %arg1: i32) -> (i32, i32, i32, i32) {
    %c0_i32 = arith.constant 0 : i32
    %c0_i32_0 = arith.constant 0 : i32
    %c0_i32_1 = arith.constant 0 : i32
    return %arg0, %arg1, %c0_i32, %c0_i32_0 : i32, i32, i32, i32
  }
  func.func @transform_1(%arg0: i32, %arg1: i32) -> (i32, i32, i32, i32, i32) {
    %c0_i32 = arith.constant 0 : i32
    %c0_i32_0 = arith.constant 0 : i32
    %c0_i32_1 = arith.constant 0 : i32
    %c0_i32_2 = arith.constant 0 : i32
    return %arg0, %c0_i32, %arg1, %c0_i32_0, %c0_i32_1 : i32, i32, i32, i32, i32
  }
  func.func @transform_2(%arg0: i32, %arg1: i32) -> (i32, i32, i32) {
    %c0_i32 = arith.constant 0 : i32
    %c0_i32_0 = arith.constant 0 : i32
    %c0_i32_1 = arith.constant 0 : i32
    return %arg0, %c0_i32, %c0_i32_0 : i32, i32, i32
  }
  func.func @transform_3(%arg0: i32, %arg1: i32) -> (i32, i32, i32) {
    %c0_i32 = arith.constant 0 : i32
    %c0_i32_0 = arith.constant 0 : i32
    %c0_i32_1 = arith.constant 0 : i32
    return %arg0, %c0_i32, %c0_i32_0 : i32, i32, i32
  }
}

module attributes {stable_mosaic.version = 11 : i64} {
  func.func @_scale_kernel(%arg0: i32, %arg1: i32, %arg2: memref<1x1xf32, #tpu.memory_space<smem>>, %arg3: memref<1x2x1x8x128xf32, #tpu.memory_space<vmem>>, %arg4: memref<1x2x1x8x128xf32, #tpu.memory_space<vmem>>) attributes {dimension_semantics = [#tpu.dimension_semantics<parallel>, #tpu.dimension_semantics<parallel>], iteration_bounds = array<i64: 2, 1>, scalar_prefetch = 0 : i64, scratch_operands = 0 : i64, tpu.core_type = #tpu.core_type<tc>, window_params = [{transform_indices = @transform_0, window_bounds = array<i64: 1, 1>}, {transform_indices = @transform_1, window_bounds = array<i64: 1, 2, 1, 8, 128>}, {transform_indices = @transform_2, window_bounds = array<i64: 1, 2, 1, 8, 128>}]} {
    %c0 = arith.constant 0 : index
    %c0_0 = arith.constant 0 : index
    %c0_1 = arith.constant 0 : index
    %c0_2 = arith.constant 0 : index
    %c0_3 = arith.constant 0 : index
    %0 = vector.load %arg3[%c0, %c0_0, %c0_1, %c0_2, %c0_3] : memref<1x2x1x8x128xf32, #tpu.memory_space<vmem>>, vector<1x2x1x8x128xf32>
    %c0_4 = arith.constant 0 : index
    %c0_5 = arith.constant 0 : index
    %1 = memref.load %arg2[%c0_4, %c0_5] : memref<1x1xf32, #tpu.memory_space<smem>>
    %2 = vector.broadcast %1 : f32 to vector<1x2x1x8x128xf32>
    %3 = arith.mulf %0, %2 : vector<1x2x1x8x128xf32>
    %c0_6 = arith.constant 0 : index
    %c0_7 = arith.constant 0 : index
    %c0_8 = arith.constant 0 : index
    %c0_9 = arith.constant 0 : index
    %c0_10 = arith.constant 0 : index
    %4 = vector.load %arg4[%c0_6, %c0_7, %c0_8, %c0_9, %c0_10] : memref<1x2x1x8x128xf32, #tpu.memory_space<vmem>>, vector<1x2x1x8x128xf32>
    tpu.vector_store %arg4[%c0_6, %c0_7, %c0_8, %c0_9, %c0_10], %3 {strides = array<i32>} : memref<1x2x1x8x128xf32, #tpu.memory_space<vmem>>, vector<1x2x1x8x128xf32>,
    return
  }
  func.func @transform_0(%arg0: i32, %arg1: i32) -> (i32, i32) {
    %c0_i32 = arith.constant 0 : i32
    %c0_i32_0 = arith.constant 0 : i32
    %c0_i32_1 = arith.constant 0 : i32
    return %c0_i32, %c0_i32_0 : i32, i32
  }
  func.func @transform_1(%arg0: i32, %arg1: i32) -> (i32, i32, i32, i32, i32) {
    %c0_i32 = arith.constant 0 : i32
    %c0_i32_0 = arith.constant 0 : i32
    %c0_i32_1 = arith.constant 0 : i32
    %c0_i32_2 = arith.constant 0 : i32
    return %arg0, %c0_i32, %arg1, %c0_i32_0, %c0_i32_1 : i32, i32, i32, i32, i32
  }
  func.func @transform_2(%arg0: i32, %arg1: i32) -> (i32, i32, i32, i32, i32) {
    %c0_i32 = arith.constant 0 : i32
    %c0_i32_0 = arith.constant 0 : i32
    %c0_i32_1 = arith.constant 0 : i32
    %c0_i32_2 = arith.constant 0 : i32
    return %arg0, %c0_i32, %arg1, %c0_i32_0, %c0_i32_1 : i32, i32, i32, i32, i32
  }
}

</mosaic_0001>

<llo_original>
// kernel: _separate_and_rescale.2
$region0: #{_separate_and_rescale.2}
  #allocation0 [shape = 'u32[]', space=smem, size = 0x4, offset = 0x4, fixed_abs, tag = 'smem constant byte address 0x4 - core index']
  #allocation1 [shape = 'u32[144,128]{1,0:T(1,128)}', space=vmem, size = 0x12000, scoped, tag = 'internal scratch']
  %s0 = inlined_call_operand.vmem [shape: f32[2,1,8,128], index: 0, kind: input, shape index: {}]
  %s1 = inlined_call_operand.vmem [shape: f32[2,2,1,8,128], index: 1, kind: output, shape index: {0}]
  %s2 = inlined_call_operand.vmem [shape: f32[2,8,128], index: 2, kind: output, shape index: {1}]
  %s3 = inlined_call_operand.vmem [shape: f32[2,8,128], index: 3, kind: output, shape index: {2}]
  %4 = xla_tuple %s1, %s2, %s3
  %s5 = sld [smem:[#allocation0]]
  $region57: #{_separate_and_rescale.2} parent=0
    _
  %s7 = ssub.s32 1, %s5
  %s8 = scalar_select 0, %s7, %s5
  loop: start=0, step=1, limit=4
  $region2: #{_separate_and_rescale.2} parent=0 // loop_pre_header
    _
  $region3: #{_separate_and_rescale.2} parent=0 // loop_header
    %s10 = sphi 0, %s14
    %p11 = scmp.ge.s32.totalorder %s10, 4
    %s17 = sphi 0, %s29
    %s18 = sphi 0, %s25
    %s19 = sphi 0, %s17
    %s20 = sphi 0, %s18
    %s21 = sphi 0, %s19
    %s22 = sphi 0, %s20
    %s34 = sphi 0, %s36
    %s37 = sphi 0, %s34
    %s38 = sphi 0, %s37
    %s54 = sphi 0, %s38
    %s62 = sphi 0, %s64
    %s65 = sphi 0, %s62
    %s66 = sphi 0, %s65
    %s82 = sphi 0, %s66
    %s88 = sphi 0, %s90
    %s91 = sphi 0, %s88
    %s92 = sphi 0, %s91
    %s108 = sphi 0, %s92
    %s114 = sphi 0, %s116
    %s117 = sphi 0, %s114
    %s118 = sphi 0, %s117
    %s134 = sphi 0, %s118
  $region4: #{_separate_and_rescale.2} parent=0 // loop_header_branch
    %13 = sbr.rel (%p11) target = $region8
  $region5: #{_separate_and_rescale.2} parent=0 // loop_body
    %s15 = ssub.s32 %s10, 1
    %s16 = ssub.s32 %s10, 2
    %s23 = sadd.s32 1, %s18
    %p24 = scmp.ge.s32.totalorder %s23, 1
    %s25 = scalar_select %p24, 0, %s23
    %s26 = sadd.s32 1, %s17
    %s27 = scalar_select %p24, %s26, %s17
    %p28 = scmp.ge.s32.totalorder %s27, 2
    %s29 = scalar_select %p28, 0, %s27
    %s30 = ssub.s32 %s17, %s29
    %s31 = ssub.s32 %s18, %s25
    %s32 = sor.u32 %s30, %s31
    %p33 = scmp.eq.s32.totalorder %s32, 0
    %s35 = sadd.s32 %s34, 1
    %s36 = scalar_select %p33, %s34, %s35
    %p39 = pneg %p33
    %p40 = scmp.eq.s32.totalorder %s10, 1
    %p41 = por %p39, %p40
    %p42 = scmp.ne.s32.totalorder %s34, %s37
    %p43 = scmp.eq.s32.totalorder %s10, 0
    %p44 = por %p42, %p43
    %p45 = scmp.ne.s32.totalorder %s34, %s37
    %p46 = scmp.eq.s32.totalorder %s15, 1
    %p47 = por %p45, %p46
    %p48 = scmp.ne.s32.totalorder %s37, %s38
    %p49 = scmp.eq.s32.totalorder %s15, 0
    %p50 = por %p48, %p49
    %p51 = scmp.ne.s32.totalorder %s37, %s38
    %p52 = scmp.eq.s32.totalorder %s16, 1
    %p53 = por %p51, %p52
    %p55 = scmp.ne.s32.totalorder %s38, %s54
    %p56 = scmp.eq.s32.totalorder %s16, 0
    %p57 = por %p55, %p56
    %s58 = ssub.s32 %s17, %s29
    %s59 = ssub.s32 %s18, %s25
    %s60 = sor.u32 %s58, %s59
    %p61 = scmp.eq.s32.totalorder %s60, 0
    %s63 = sadd.s32 %s62, 1
    %s64 = scalar_select %p61, %s62, %s63
    %p67 = pneg %p61
    %p68 = scmp.eq.s32.totalorder %s10, 1
    %p69 = por %p67, %p68
    %p70 = scmp.ne.s32.totalorder %s62, %s65
    %p71 = scmp.eq.s32.totalorder %s10, 0
    %p72 = por %p70, %p71
    %p73 = scmp.ne.s32.totalorder %s62, %s65
    %p74 = scmp.eq.s32.totalorder %s15, 1
    %p75 = por %p73, %p74
    %p76 = scmp.ne.s32.totalorder %s65, %s66
    %p77 = scmp.eq.s32.totalorder %s15, 0
    %p78 = por %p76, %p77
    %p79 = scmp.ne.s32.totalorder %s65, %s66
    %p80 = scmp.eq.s32.totalorder %s16, 1
    %p81 = por %p79, %p80
    %p83 = scmp.ne.s32.totalorder %s66, %s82
    %p84 = scmp.eq.s32.totalorder %s16, 0
    %p85 = por %p83, %p84
    %s86 = ssub.s32 %s17, %s29
    %p87 = scmp.eq.s32.totalorder %s86, 0
    %s89 = sadd.s32 %s88, 1
    %s90 = scalar_select %p87, %s88, %s89
    %p93 = pneg %p87
    %p94 = scmp.eq.s32.totalorder %s10, 1
    %p95 = por %p93, %p94
    %p96 = scmp.ne.s32.totalorder %s88, %s91
    %p97 = scmp.eq.s32.totalorder %s10, 0
    %p98 = por %p96, %p97
    %p99 = scmp.ne.s32.totalorder %s88, %s91
    %p100 = scmp.eq.s32.totalorder %s15, 1
    %p101 = por %p99, %p100
    %p102 = scmp.ne.s32.totalorder %s91, %s92
    %p103 = scmp.eq.s32.totalorder %s15, 0
    %p104 = por %p102, %p103
    %p105 = scmp.ne.s32.totalorder %s91, %s92
    %p106 = scmp.eq.s32.totalorder %s16, 1
    %p107 = por %p105, %p106
    %p109 = scmp.ne.s32.totalorder %s92, %s108
    %p110 = scmp.eq.s32.totalorder %s16, 0
    %p111 = por %p109, %p110
    %s112 = ssub.s32 %s17, %s29
    %p113 = scmp.eq.s32.totalorder %s112, 0
    %s115 = sadd.s32 %s114, 1
    %s116 = scalar_select %p113, %s114, %s115
    %p119 = pneg %p113
    %p120 = scmp.eq.s32.totalorder %s10, 1
    %p121 = por %p119, %p120
    %p122 = scmp.ne.s32.totalorder %s114, %s117
    %p123 = scmp.eq.s32.totalorder %s10, 0
    %p124 = por %p122, %p123
    %p125 = scmp.ne.s32.totalorder %s114, %s117
    %p126 = scmp.eq.s32.totalorder %s15, 1
    %p127 = por %p125, %p126
    %p128 = scmp.ne.s32.totalorder %s117, %s118
    %p129 = scmp.eq.s32.totalorder %s15, 0
    %p130 = por %p128, %p129
    %p131 = scmp.ne.s32.totalorder %s117, %s118
    %p132 = scmp.eq.s32.totalorder %s16, 1
    %p133 = por %p131, %p132
    %p135 = scmp.ne.s32.totalorder %s118, %s134
    %p136 = scmp.eq.s32.totalorder %s16, 0
    %p137 = por %p135, %p136
    %p138 = scmp.le.s32.totalorder 1, %s10
    %p139 = scmp.lt.s32.totalorder %s10, 3
    %p140 = pnand %p138, %p139
    %p141 = pneg %p140
    // Predicated region
    $region9: #{_separate_and_rescale.2} parent=5 // pred_check
      _
    $region10: #{_separate_and_rescale.2} parent=5 // pred_check_branch
      %143 = sbr.rel (%p140) target = $region12
    $region11: #{_separate_and_rescale.2} parent=5 // pred_region
      %s144 = ssub.s32 %s10, 1
    $region12: #{_separate_and_rescale.2} parent=5 // pred_fallthru
      _
    %p145 = scmp.lt.s32.totalorder %s10, 2
    // Predicated region
    $region13: #{_separate_and_rescale.2} parent=5 // pred_check
      %p146 = pneg %p145
    $region14: #{_separate_and_rescale.2} parent=5 // pred_check_branch
      %148 = sbr.rel (%p146) target = $region16
    $region15: #{_separate_and_rescale.2} parent=5 // pred_region
      // Predicated region
      $region17: #{_separate_and_rescale.2} parent=15 // pred_check
        %p149 = pneg %p44
      $region18: #{_separate_and_rescale.2} parent=15 // pred_check_branch
        %151 = sbr.rel (%p149) target = $region20
      $region19: #{_separate_and_rescale.2} parent=15 // pred_region
        %p152 = scmp.lt.s32.totalorder %s17, 1
        %s153 = scalar_select %p152, %s17, 1
        %p154 = scmp.lt.s32.totalorder %s18, 0
        %s155 = scalar_select %p154, %s18, 0
        %s156 = sadd.s32 %s155, %s153
        %s157 = smul.addr %s156, 8
        %s158 = scalar_lea.vmem %s0, %s157
      $region20: #{_separate_and_rescale.2} parent=15 // pred_fallthru
        _
    $region16: #{_separate_and_rescale.2} parent=5 // pred_fallthru
      _
    %p159 = scmp.le.s32.totalorder 1, %s10
    %p160 = scmp.lt.s32.totalorder %s10, 3
    %p161 = pnand %p159, %p160
    %p162 = pneg %p161
    // Predicated region
    $region21: #{_separate_and_rescale.2} parent=5 // pred_check
      _
    $region22: #{_separate_and_rescale.2} parent=5 // pred_check_branch
      %164 = sbr.rel (%p161) target = $region24
    $region23: #{_separate_and_rescale.2} parent=5 // pred_region
      %s165 = ssub.s32 %s10, 1
      %p166 = scmp.lt.s32.totalorder %s19, 1
      %s167 = scalar_select %p166, %s19, 1
      %p168 = scmp.lt.s32.totalorder %s20, 0
      %s169 = scalar_select %p168, %s20, 0
      %s170 = sadd.s32 %s169, %s167
      %s171 = smul.addr %s170, 8
      %s172 = scalar_lea.vmem %s0, %s171
      %p173 = pneg %p50
      %p174 = pneg %p47
      %p175 = pneg %p78
      %p176 = pneg %p75
      %p177 = scmp.lt.s32.totalorder %s19, 1
      %s178 = scalar_select %p177, %s19, 1
      %p179 = scmp.lt.s32.totalorder %s20, 0
      %s180 = scalar_select %p179, %s20, 0
      %s181 = smul.addr %s178, 2
      %s182 = sadd.s32 %s180, %s181
      %s183 = smul.addr %s182, 8
      %s184 = scalar_lea.vmem %s1, %s183
      %p185 = pneg %p104
      %p186 = pneg %p101
      %p187 = scmp.lt.s32.totalorder %s19, 1
      %s188 = scalar_select %p187, %s19, 1
      %s189 = smul.addr %s188, 8
      %s190 = scalar_lea.vmem %s2, %s189
      %p191 = pneg %p130
      %p192 = pneg %p127
      %p193 = scmp.lt.s32.totalorder %s19, 1
      %s194 = scalar_select %p193, %s19, 1
      %s195 = smul.addr %s194, 8
      %s196 = scalar_lea.vmem %s3, %s195
      %p197 = scmp.lt.s32.totalorder %s19, 1
      %s198 = scalar_select %p197, %s19, 1
      %p199 = scmp.lt.s32.totalorder %s20, 0
      %s200 = scalar_select %p199, %s20, 0
      %s201 = sadd.s32 %s200, %s198
      %s202 = smul.addr %s201, 8
      %s203 = scalar_lea.vmem %s0, %s202
      %p204 = scmp.lt.s32.totalorder %s19, 1
      %s205 = scalar_select %p204, %s19, 1
      %p206 = scmp.lt.s32.totalorder %s20, 0
      %s207 = scalar_select %p206, %s20, 0
      %s208 = smul.addr %s205, 2
      %s209 = sadd.s32 %s207, %s208
      %s210 = smul.addr %s209, 8
      %s211 = scalar_lea.vmem %s1, %s210
      %p212 = scmp.lt.s32.totalorder %s19, 1
      %s213 = scalar_select %p212, %s19, 1
      %s214 = smul.addr %s213, 8
      %s215 = scalar_lea.vmem %s2, %s214
      %p216 = scmp.lt.s32.totalorder %s19, 1
      %s217 = scalar_select %p216, %s19, 1
      %s218 = smul.addr %s217, 8
      %s219 = scalar_lea.vmem %s3, %s218
      %p220 = scmp.eq.s32.totalorder %s20, 0
      // Predicated region
      $region25: #{_separate_and_rescale.2} parent=23 // pred_check
        %p221 = pneg %p220
      $region26: #{_separate_and_rescale.2} parent=23 // pred_check_branch
        %223 = sbr.rel (%p221) target = $region28
      $region27: #{_separate_and_rescale.2} parent=23 // pred_region
        %224 = vst [vmem:[%s215] sm:$0xff] 0.0
        %225 = vst [vmem:[%s219] sm:$0xff] 0.0
      $region28: #{_separate_and_rescale.2} parent=23 // pred_fallthru
        _
      %v226 = vld [vmem:[%s203] sm:$0xff]
      %v227 = vmul.f32 %v226, 0.5
      %v228 = vmul.f32 %v226, -0.3
      %229 = vst [vmem:[%s211] sm:$0xff] %v227
      %s230 = scalar_lea.vmem %s211, 8
      %231 = vst [vmem:[%s230] sm:$0xff] %v228
      %v232 = vld [vmem:[%s215] sm:$0xff]
      %v233 = vand.u32 2147483647, %v226
      %v234 = vadd.f32 %v233, 0.0
      %v235 = vadd.f32 %v232, %v234
      %236 = vst [vmem:[%s215] sm:$0xff] %v235
      %v237 = vld [vmem:[%s219] sm:$0xff]
      %v238 = vand.u32 2147483647, %v227
      %v239 = vand.u32 2147483647, %v228
      %v240 = vadd.f32 %v238, %v239
      %v241 = vadd.f32 %v240, 0.0
      %v242 = vadd.f32 %v237, %v241
      %243 = vst [vmem:[%s219] sm:$0xff] %v242
      %p244 = scmp.lt.s32.totalorder %s19, 1
      %s245 = scalar_select %p244, %s19, 1
      %p246 = scmp.lt.s32.totalorder %s20, 0
      %s247 = scalar_select %p246, %s20, 0
      %s248 = smul.addr %s245, 2
      %s249 = sadd.s32 %s247, %s248
      %s250 = smul.addr %s249, 8
      %s251 = scalar_lea.vmem %s1, %s250
      %p252 = scmp.lt.s32.totalorder %s19, 1
      %s253 = scalar_select %p252, %s19, 1
      %s254 = smul.addr %s253, 8
      %s255 = scalar_lea.vmem %s2, %s254
      %p256 = scmp.lt.s32.totalorder %s19, 1
      %s257 = scalar_select %p256, %s19, 1
      %s258 = smul.addr %s257, 8
      %s259 = scalar_lea.vmem %s3, %s258
      // Predicated region
      $region29: #{_separate_and_rescale.2} parent=23 // pred_check
        %p260 = pneg %p75
      $region30: #{_separate_and_rescale.2} parent=23 // pred_check_branch
        %262 = sbr.rel (%p260) target = $region32
      $region31: #{_separate_and_rescale.2} parent=23 // pred_region
        _
      $region32: #{_separate_and_rescale.2} parent=23 // pred_fallthru
        _
      // Predicated region
      $region33: #{_separate_and_rescale.2} parent=23 // pred_check
        %p263 = pneg %p101
      $region34: #{_separate_and_rescale.2} parent=23 // pred_check_branch
        %265 = sbr.rel (%p263) target = $region36
      $region35: #{_separate_and_rescale.2} parent=23 // pred_region
        _
      $region36: #{_separate_and_rescale.2} parent=23 // pred_fallthru
        _
      // Predicated region
      $region37: #{_separate_and_rescale.2} parent=23 // pred_check
        %p266 = pneg %p127
      $region38: #{_separate_and_rescale.2} parent=23 // pred_check_branch
        %268 = sbr.rel (%p266) target = $region40
      $region39: #{_separate_and_rescale.2} parent=23 // pred_region
        _
      $region40: #{_separate_and_rescale.2} parent=23 // pred_fallthru
        _
    $region24: #{_separate_and_rescale.2} parent=5 // pred_fallthru
      _
    %p269 = scmp.le.s32.totalorder 2, %s10
    // Predicated region
    $region41: #{_separate_and_rescale.2} parent=5 // pred_check
      %p270 = pneg %p269
    $region42: #{_separate_and_rescale.2} parent=5 // pred_check_branch
      %272 = sbr.rel (%p270) target = $region44
    $region43: #{_separate_and_rescale.2} parent=5 // pred_region
      %s273 = ssub.s32 %s10, 2
      // Predicated region
      $region45: #{_separate_and_rescale.2} parent=43 // pred_check
        %p274 = pneg %p81
      $region46: #{_separate_and_rescale.2} parent=43 // pred_check_branch
        %276 = sbr.rel (%p274) target = $region48
      $region47: #{_separate_and_rescale.2} parent=43 // pred_region
        %p277 = scmp.lt.s32.totalorder %s21, 1
        %s278 = scalar_select %p277, %s21, 1
        %p279 = scmp.lt.s32.totalorder %s22, 0
        %s280 = scalar_select %p279, %s22, 0
        %s281 = smul.addr %s278, 2
        %s282 = sadd.s32 %s280, %s281
        %s283 = smul.addr %s282, 8
        %s284 = scalar_lea.vmem %s1, %s283
      $region48: #{_separate_and_rescale.2} parent=43 // pred_fallthru
        _
      // Predicated region
      $region49: #{_separate_and_rescale.2} parent=43 // pred_check
        %p285 = pneg %p107
      $region50: #{_separate_and_rescale.2} parent=43 // pred_check_branch
        %287 = sbr.rel (%p285) target = $region52
      $region51: #{_separate_and_rescale.2} parent=43 // pred_region
        %p288 = scmp.lt.s32.totalorder %s21, 1
        %s289 = scalar_select %p288, %s21, 1
        %s290 = smul.addr %s289, 8
        %s291 = scalar_lea.vmem %s2, %s290
      $region52: #{_separate_and_rescale.2} parent=43 // pred_fallthru
        _
      // Predicated region
      $region53: #{_separate_and_rescale.2} parent=43 // pred_check
        %p292 = pneg %p133
      $region54: #{_separate_and_rescale.2} parent=43 // pred_check_branch
        %294 = sbr.rel (%p292) target = $region56
      $region55: #{_separate_and_rescale.2} parent=43 // pred_region
        %p295 = scmp.lt.s32.totalorder %s21, 1
        %s296 = scalar_select %p295, %s21, 1
        %s297 = smul.addr %s296, 8
        %s298 = scalar_lea.vmem %s3, %s297
      $region56: #{_separate_and_rescale.2} parent=43 // pred_fallthru
        _
    $region44: #{_separate_and_rescale.2} parent=5 // pred_fallthru
      _
  $region6: #{_separate_and_rescale.2} parent=0 // loop_footer
    %s14 = sadd.s32 1, %s10
  $region7: #{_separate_and_rescale.2} parent=0 // loop_footer_branch
    %9 = sbr.rel target = $region3
  $region8: #{_separate_and_rescale.2} parent=0 // loop_exit
    _

// kernel: _separate_and_rescale.3
$region0: #{_separate_and_rescale.3}
  #allocation0 [shape = 'u32[]', space=smem, size = 0x4, offset = 0x4, fixed_abs, tag = 'smem constant byte address 0x4 - core index']
  #allocation1 [shape = 'u32[144,128]{1,0:T(1,128)}', space=vmem, size = 0x12000, scoped, tag = 'internal scratch']
  #allocation2 [shape = 'f32[1,1]{1,0:T(1,128)S(6)}', space=smem, size = 0x200, scoped, tag = 'scoped memory for _separate_and_rescale.3']
  %s0 = inlined_call_operand.<no memory space> [shape: f32[1,1], index: 0, kind: input, shape index: {}]
  %s1 = inlined_call_operand.vmem [shape: f32[2,2,1,8,128], index: 1, kind: input, shape index: {}, may-alias: {1,2}]
  %s2 = inlined_call_operand.vmem [shape: f32[2,2,1,8,128], index: 2, kind: output, shape index: {}, may-alias: {1,2}]
  %s3 = sld [smem:[#allocation0]]
  $region41: #{_separate_and_rescale.3} parent=0
    _
  %s5 = ssub.s32 1, %s3
  %s6 = scalar_select 0, %s5, %s3
  %7 = sst [smem:[#allocation2]] %s0
  loop: start=0, step=1, limit=4
  $region2: #{_separate_and_rescale.3} parent=0 // loop_pre_header
    _
  $region3: #{_separate_and_rescale.3} parent=0 // loop_header
    %s9 = sphi 0, %s13
    %p10 = scmp.ge.s32.totalorder %s9, 4
    %s16 = sphi 0, %s28
    %s17 = sphi 0, %s24
    %s18 = sphi 0, %s16
    %s19 = sphi 0, %s17
    %s20 = sphi 0, %s18
    %s21 = sphi 0, %s19
    %s29 = sphi 0, %s29
    %s31 = sphi 0, %s29
    %s32 = sphi 0, %s31
    %s46 = sphi 0, %s32
    %s54 = sphi 0, %s56
    %s57 = sphi 0, %s54
    %s58 = sphi 0, %s57
    %s74 = sphi 0, %s58
    %s82 = sphi 0, %s84
    %s85 = sphi 0, %s82
    %s86 = sphi 0, %s85
    %s102 = sphi 0, %s86
  $region4: #{_separate_and_rescale.3} parent=0 // loop_header_branch
    %12 = sbr.rel (%p10) target = $region8
  $region5: #{_separate_and_rescale.3} parent=0 // loop_body
    %s14 = ssub.s32 %s9, 1
    %s15 = ssub.s32 %s9, 2
    %s22 = sadd.s32 1, %s17
    %p23 = scmp.ge.s32.totalorder %s22, 1
    %s24 = scalar_select %p23, 0, %s22
    %s25 = sadd.s32 1, %s16
    %s26 = scalar_select %p23, %s25, %s16
    %p27 = scmp.ge.s32.totalorder %s26, 2
    %s28 = scalar_select %p27, 0, %s26
    %s30 = sadd.s32 %s29, 1
    %p33 = scmp.eq.s32.totalorder %s9, 1
    %p34 = scmp.ne.s32.totalorder %s29, %s31
    %p35 = scmp.eq.s32.totalorder %s9, 0
    %p36 = por %p34, %p35
    %p37 = scmp.ne.s32.totalorder %s29, %s31
    %p38 = scmp.eq.s32.totalorder %s14, 1
    %p39 = por %p37, %p38
    %p40 = scmp.ne.s32.totalorder %s31, %s32
    %p41 = scmp.eq.s32.totalorder %s14, 0
    %p42 = por %p40, %p41
    %p43 = scmp.ne.s32.totalorder %s31, %s32
    %p44 = scmp.eq.s32.totalorder %s15, 1
    %p45 = por %p43, %p44
    %p47 = scmp.ne.s32.totalorder %s32, %s46
    %p48 = scmp.eq.s32.totalorder %s15, 0
    %p49 = por %p47, %p48
    %s50 = ssub.s32 %s16, %s28
    %s51 = ssub.s32 %s17, %s24
    %s52 = sor.u32 %s50, %s51
    %p53 = scmp.eq.s32.totalorder %s52, 0
    %s55 = sadd.s32 %s54, 1
    %s56 = scalar_select %p53, %s54, %s55
    %p59 = pneg %p53
    %p60 = scmp.eq.s32.totalorder %s9, 1
    %p61 = por %p59, %p60
    %p62 = scmp.ne.s32.totalorder %s54, %s57
    %p63 = scmp.eq.s32.totalorder %s9, 0
    %p64 = por %p62, %p63
    %p65 = scmp.ne.s32.totalorder %s54, %s57
    %p66 = scmp.eq.s32.totalorder %s14, 1
    %p67 = por %p65, %p66
    %p68 = scmp.ne.s32.totalorder %s57, %s58
    %p69 = scmp.eq.s32.totalorder %s14, 0
    %p70 = por %p68, %p69
    %p71 = scmp.ne.s32.totalorder %s57, %s58
    %p72 = scmp.eq.s32.totalorder %s15, 1
    %p73 = por %p71, %p72
    %p75 = scmp.ne.s32.totalorder %s58, %s74
    %p76 = scmp.eq.s32.totalorder %s15, 0
    %p77 = por %p75, %p76
    %s78 = ssub.s32 %s16, %s28
    %s79 = ssub.s32 %s17, %s24
    %s80 = sor.u32 %s78, %s79
    %p81 = scmp.eq.s32.totalorder %s80, 0
    %s83 = sadd.s32 %s82, 1
    %s84 = scalar_select %p81, %s82, %s83
    %p87 = pneg %p81
    %p88 = scmp.eq.s32.totalorder %s9, 1
    %p89 = por %p87, %p88
    %p90 = scmp.ne.s32.totalorder %s82, %s85
    %p91 = scmp.eq.s32.totalorder %s9, 0
    %p92 = por %p90, %p91
    %p93 = scmp.ne.s32.totalorder %s82, %s85
    %p94 = scmp.eq.s32.totalorder %s14, 1
    %p95 = por %p93, %p94
    %p96 = scmp.ne.s32.totalorder %s85, %s86
    %p97 = scmp.eq.s32.totalorder %s14, 0
    %p98 = por %p96, %p97
    %p99 = scmp.ne.s32.totalorder %s85, %s86
    %p100 = scmp.eq.s32.totalorder %s15, 1
    %p101 = por %p99, %p100
    %p103 = scmp.ne.s32.totalorder %s86, %s102
    %p104 = scmp.eq.s32.totalorder %s15, 0
    %p105 = por %p103, %p104
    %p106 = scmp.le.s32.totalorder 1, %s9
    %p107 = scmp.lt.s32.totalorder %s9, 3
    %p108 = pnand %p106, %p107
    %p109 = pneg %p108
    // Predicated region
    $region9: #{_separate_and_rescale.3} parent=5 // pred_check
      _
    $region10: #{_separate_and_rescale.3} parent=5 // pred_check_branch
      %111 = sbr.rel (%p108) target = $region12
    $region11: #{_separate_and_rescale.3} parent=5 // pred_region
      %s112 = ssub.s32 %s9, 1
      // Predicated region
      $region13: #{_separate_and_rescale.3} parent=11 // pred_check
        %p113 = pneg %p42
      $region14: #{_separate_and_rescale.3} parent=11 // pred_check_branch
        %115 = sbr.rel (%p113) target = $region16
      $region15: #{_separate_and_rescale.3} parent=11 // pred_region
        _
      $region16: #{_separate_and_rescale.3} parent=11 // pred_fallthru
        _
    $region12: #{_separate_and_rescale.3} parent=5 // pred_fallthru
      _
    %p116 = scmp.lt.s32.totalorder %s9, 2
    // Predicated region
    $region17: #{_separate_and_rescale.3} parent=5 // pred_check
      %p117 = pneg %p116
    $region18: #{_separate_and_rescale.3} parent=5 // pred_check_branch
      %119 = sbr.rel (%p117) target = $region20
    $region19: #{_separate_and_rescale.3} parent=5 // pred_region
      // Predicated region
      $region21: #{_separate_and_rescale.3} parent=19 // pred_check
        %p120 = pneg %p64
      $region22: #{_separate_and_rescale.3} parent=19 // pred_check_branch
        %122 = sbr.rel (%p120) target = $region24
      $region23: #{_separate_and_rescale.3} parent=19 // pred_region
        %p123 = scmp.lt.s32.totalorder %s16, 1
        %s124 = scalar_select %p123, %s16, 1
        %p125 = scmp.lt.s32.totalorder %s17, 0
        %s126 = scalar_select %p125, %s17, 0
        %s127 = smul.addr %s124, 2
        %s128 = sadd.s32 %s126, %s127
        %s129 = smul.addr %s128, 8
        %s130 = scalar_lea.vmem %s1, %s129
      $region24: #{_separate_and_rescale.3} parent=19 // pred_fallthru
        _
    $region20: #{_separate_and_rescale.3} parent=5 // pred_fallthru
      _
    %p131 = scmp.le.s32.totalorder 1, %s9
    %p132 = scmp.lt.s32.totalorder %s9, 3
    %p133 = pnand %p131, %p132
    %p134 = pneg %p133
    // Predicated region
    $region25: #{_separate_and_rescale.3} parent=5 // pred_check
      _
    $region26: #{_separate_and_rescale.3} parent=5 // pred_check_branch
      %136 = sbr.rel (%p133) target = $region28
    $region27: #{_separate_and_rescale.3} parent=5 // pred_region
      %s137 = ssub.s32 %s9, 1
      %p138 = pneg %p42
      %p139 = pneg %p39
      %p140 = scmp.lt.s32.totalorder %s18, 1
      %s141 = scalar_select %p140, %s18, 1
      %p142 = scmp.lt.s32.totalorder %s19, 0
      %s143 = scalar_select %p142, %s19, 0
      %s144 = smul.addr %s141, 2
      %s145 = sadd.s32 %s143, %s144
      %s146 = smul.addr %s145, 8
      %s147 = scalar_lea.vmem %s1, %s146
      %p148 = pneg %p70
      %p149 = pneg %p67
      %p150 = pneg %p98
      %p151 = pneg %p95
      %p152 = scmp.lt.s32.totalorder %s18, 1
      %s153 = scalar_select %p152, %s18, 1
      %p154 = scmp.lt.s32.totalorder %s19, 0
      %s155 = scalar_select %p154, %s19, 0
      %s156 = smul.addr %s153, 2
      %s157 = sadd.s32 %s155, %s156
      %s158 = smul.addr %s157, 8
      %s159 = scalar_lea.vmem %s2, %s158
      %p160 = scmp.lt.s32.totalorder %s18, 1
      %s161 = scalar_select %p160, %s18, 1
      %p162 = scmp.lt.s32.totalorder %s19, 0
      %s163 = scalar_select %p162, %s19, 0
      %s164 = smul.addr %s161, 2
      %s165 = sadd.s32 %s163, %s164
      %s166 = smul.addr %s165, 8
      %s167 = scalar_lea.vmem %s1, %s166
      %p168 = scmp.lt.s32.totalorder %s18, 1
      %s169 = scalar_select %p168, %s18, 1
      %p170 = scmp.lt.s32.totalorder %s19, 0
      %s171 = scalar_select %p170, %s19, 0
      %s172 = smul.addr %s169, 2
      %s173 = sadd.s32 %s171, %s172
      %s174 = smul.addr %s173, 8
      %s175 = scalar_lea.vmem %s2, %s174
      %v176 = vld [vmem:[%s167] sm:$0xff]
      %v177 = vld [vmem:[%s167 + $0x8] sm:$0xff]
      %s178 = sld [smem:[#allocation2]]
      %v179 = vstv %s178
      %v180 = vmul.f32 %v176, %v179
      %v181 = vmul.f32 %v177, %v179
      %182 = vst [vmem:[%s175] sm:$0xff] %v180
      %183 = vst [vmem:[%s175 + $0x8] sm:$0xff] %v181
      %p184 = scmp.lt.s32.totalorder %s18, 1
      %s185 = scalar_select %p184, %s18, 1
      %p186 = scmp.lt.s32.totalorder %s19, 0
      %s187 = scalar_select %p186, %s19, 0
      %s188 = smul.addr %s185, 2
      %s189 = sadd.s32 %s187, %s188
      %s190 = smul.addr %s189, 8
      %s191 = scalar_lea.vmem %s2, %s190
      // Predicated region
      $region29: #{_separate_and_rescale.3} parent=27 // pred_check
        %p192 = pneg %p95
      $region30: #{_separate_and_rescale.3} parent=27 // pred_check_branch
        %194 = sbr.rel (%p192) target = $region32
      $region31: #{_separate_and_rescale.3} parent=27 // pred_region
        _
      $region32: #{_separate_and_rescale.3} parent=27 // pred_fallthru
        _
    $region28: #{_separate_and_rescale.3} parent=5 // pred_fallthru
      _
    %p195 = scmp.le.s32.totalorder 2, %s9
    // Predicated region
    $region33: #{_separate_and_rescale.3} parent=5 // pred_check
      %p196 = pneg %p195
    $region34: #{_separate_and_rescale.3} parent=5 // pred_check_branch
      %198 = sbr.rel (%p196) target = $region36
    $region35: #{_separate_and_rescale.3} parent=5 // pred_region
      %s199 = ssub.s32 %s9, 2
      // Predicated region
      $region37: #{_separate_and_rescale.3} parent=35 // pred_check
        %p200 = pneg %p101
      $region38: #{_separate_and_rescale.3} parent=35 // pred_check_branch
        %202 = sbr.rel (%p200) target = $region40
      $region39: #{_separate_and_rescale.3} parent=35 // pred_region
        %p203 = scmp.lt.s32.totalorder %s20, 1
        %s204 = scalar_select %p203, %s20, 1
        %p205 = scmp.lt.s32.totalorder %s21, 0
        %s206 = scalar_select %p205, %s21, 0
        %s207 = smul.addr %s204, 2
        %s208 = sadd.s32 %s206, %s207
        %s209 = smul.addr %s208, 8
        %s210 = scalar_lea.vmem %s2, %s209
      $region40: #{_separate_and_rescale.3} parent=35 // pred_fallthru
        _
    $region36: #{_separate_and_rescale.3} parent=5 // pred_fallthru
      _
  $region6: #{_separate_and_rescale.3} parent=0 // loop_footer
    %s13 = sadd.s32 1, %s9
  $region7: #{_separate_and_rescale.3} parent=0 // loop_footer_branch
    %8 = sbr.rel target = $region3
  $region8: #{_separate_and_rescale.3} parent=0 // loop_exit
    _

</llo_original>
